<compile_context>
chip_gen: v7x
topology: tpu7x:2x2x1
jax: 0.10.0
libtpu: 0.0.40
codegen_flags: <defaults>
</compile_context>

<pallas_src>
import functools

import jax
import jax.numpy as jnp
import numpy as np
from jax.experimental import pallas as pl
from jax.experimental.pallas import tpu as pltpu


def _npool_kernel(x_ref, o_ref, *, pool_size, stride, n_neighbor, out_size):
    f32 = jnp.float32

    # pool_size strided sublane views, each (out_size, TL) and lane-dense:
    # views[d][i, r] = x[d + i*stride, r]  (element d of output-window i).
    views = [x_ref[pl.ds(d, out_size, stride=stride), :].astype(f32)
             for d in range(pool_size)]

    # Running first-occurrence argmax across the pool_size views (VPU only).
    best = views[0]
    best_idx = jnp.zeros(best.shape, jnp.int32)
    for d in range(1, pool_size):
        take = views[d] > best            # strict '>' keeps first occurrence
        best = jnp.where(take, views[d], best)
        best_idx = jnp.where(take, jnp.int32(d), best_idx)

    eff = jnp.minimum(jnp.minimum(best_idx, (pool_size - 1) - best_idx),
                      jnp.int32(n_neighbor))
    eff = jnp.maximum(eff, 0)             # guard (NaN windows / degenerate)

    # k = 1/(eff+1) via an exact select chain over the few possible values.
    max_eff = min(n_neighbor, (pool_size - 1) // 2)
    k = jnp.full(best.shape, 1.0, f32)
    for e in range(1, max_eff + 1):
        k = jnp.where(eff == e, jnp.float32(1.0 / (e + 1)), k)

    # Weighted sum over the same views, fully element-wise.
    acc = jnp.zeros(best.shape, f32)
    for d in range(pool_size):
        dist = jnp.abs(d - best_idx)
        w = jnp.where(dist <= eff, (1.0 - dist.astype(f32) * k) * k, 0.0)
        acc = acc + w * views[d]

    o_ref[...] = acc.astype(o_ref.dtype)


def _choose_lane_tile(rows, lane=128, max_tile=1024):
    """Large lane tile, but keep >= 2 grid tiles when rows allow (v7x 2xTC)."""
    n_groups = pl.cdiv(rows, lane)
    if n_groups <= 1:
        return lane
    groups_per_tile = min(max_tile // lane, max(1, (n_groups + 1) // 2))
    return groups_per_tile * lane


def npool(x, pool_size, stride, n_neighbor):
    S, C, H, W = x.shape
    out_size = (W - pool_size) // stride + 1
    R = S * C * H

    # Rows on the lane axis: input (W, R), output (out_size, R).
    xT = x.reshape(R, W).T                                   # (W, R)

    TL = _choose_lane_tile(R)
    n_tiles = pl.cdiv(R, TL)
    R_pad = n_tiles * TL
    if R_pad != R:
        xT = jnp.pad(xT, ((0, 0), (0, R_pad - R)))

    kernel = functools.partial(
        _npool_kernel, pool_size=pool_size, stride=stride,
        n_neighbor=n_neighbor, out_size=out_size)

    out = pl.pallas_call(
        kernel,
        out_shape=jax.ShapeDtypeStruct((out_size, R_pad), x.dtype),
        grid_spec=pltpu.PrefetchScalarGridSpec(
            num_scalar_prefetch=0,
            grid=(n_tiles,),
            in_specs=[pl.BlockSpec((W, TL), lambda i: (0, i))],
            out_specs=pl.BlockSpec((out_size, TL), lambda i: (0, i)),
        ),
        compiler_params=pltpu.CompilerParams(
            dimension_semantics=("parallel",),
            # Blocks are small (<= W*TL*4 ~ 64 KiB double-buffered); 32 MiB
            # scoped VMEM is safe on v5e/v6e/v7x and leaves full headroom.
            vmem_limit_bytes=32 * 1024 * 1024,
        ),
    )(xT)

    return out[:, :R].T.reshape(S, C, H, out_size)


def npool_ref(x, pool_size, stride, n_neighbor):
    """Pure NumPy reference mirroring the PyTorch loops."""
    x = np.asarray(x, dtype=np.float32)
    S, C, H, W = x.shape
    out_size = (W - pool_size) // stride + 1
    out = np.zeros((S, C, H, out_size), dtype=np.float32)
    for s in range(S):
        for c in range(C):
            for h in range(H):
                row = x[s, c, h]
                for i in range(out_size):
                    win = row[i * stride:i * stride + pool_size]
                    m = int(np.argmax(win))
                    eff = min(m, pool_size - 1 - m, n_neighbor)
                    k = 1.0 / (eff + 1)
                    acc = 0.0
                    for d in range(-eff, eff + 1):
                        acc += (1.0 - abs(d) * k) * k * win[m + d]
                    out[s, c, h, i] = acc
    return out


if __name__ == "__main__":
    pool_size, stride, n_neighbor = 4, 2, 1
    key = jax.random.PRNGKey(0)
    x = jax.random.normal(key, (2, 4, 16, 16), dtype=jnp.float32)

    y = npool(x, pool_size, stride, n_neighbor)
    y = jax.block_until_ready(y)

    y_ref = npool_ref(np.asarray(x), pool_size, stride, n_neighbor)
    np.testing.assert_allclose(np.asarray(y), y_ref, rtol=1e-5, atol=1e-5)

    print("KERNEL_OK")
</pallas_src>

<mosaic_0001>
module attributes {stable_mosaic.version = 11 : i64} {
  func.func @_npool_kernel(%arg0: i32, %arg1: memref<16x128xf32, #tpu.memory_space<vmem>>, %arg2: memref<7x128xf32, #tpu.memory_space<vmem>>) attributes {dimension_semantics = [#tpu.dimension_semantics<parallel>], iteration_bounds = array<i64: 1>, scalar_prefetch = 0 : i64, scratch_operands = 0 : i64, tpu.core_type = #tpu.core_type<tc>, window_params = [{transform_indices = @transform_0, window_bounds = array<i64: 16, 128>}, {transform_indices = @transform_1, window_bounds = array<i64: 7, 128>}]} {
    %c0 = arith.constant 0 : index
    %c0_0 = arith.constant 0 : index
    %0 = tpu.strided_load %arg1[%c0, %c0_0] {strides = array<i32: 2, 1>} : memref<16x128xf32, #tpu.memory_space<vmem>>, vector<7x128xf32>
    %c1 = arith.constant 1 : index
    %c0_1 = arith.constant 0 : index
    %1 = tpu.strided_load %arg1[%c1, %c0_1] {strides = array<i32: 2, 1>} : memref<16x128xf32, #tpu.memory_space<vmem>>, vector<7x128xf32>
    %c2 = arith.constant 2 : index
    %c0_2 = arith.constant 0 : index
    %2 = tpu.strided_load %arg1[%c2, %c0_2] {strides = array<i32: 2, 1>} : memref<16x128xf32, #tpu.memory_space<vmem>>, vector<7x128xf32>
    %c3 = arith.constant 3 : index
    %c0_3 = arith.constant 0 : index
    %3 = tpu.strided_load %arg1[%c3, %c0_3] {strides = array<i32: 2, 1>} : memref<16x128xf32, #tpu.memory_space<vmem>>, vector<7x128xf32>
    %c0_i32 = arith.constant 0 : i32
    %4 = vector.broadcast %c0_i32 : i32 to vector<7x128xi32>
    %5 = arith.cmpf ogt, %1, %0 : vector<7x128xf32>
    %6 = arith.select %5, %1, %0 : vector<7x128xi1>, vector<7x128xf32>
    %c1_i32 = arith.constant 1 : i32
    %7 = vector.broadcast %c1_i32 : i32 to vector<7x128xi32>
    %8 = arith.select %5, %7, %4 : vector<7x128xi1>, vector<7x128xi32>
    %9 = arith.cmpf ogt, %2, %6 : vector<7x128xf32>
    %10 = arith.select %9, %2, %6 : vector<7x128xi1>, vector<7x128xf32>
    %c2_i32 = arith.constant 2 : i32
    %11 = vector.broadcast %c2_i32 : i32 to vector<7x128xi32>
    %12 = arith.select %9, %11, %8 : vector<7x128xi1>, vector<7x128xi32>
    %13 = arith.cmpf ogt, %3, %10 : vector<7x128xf32>
    %c3_i32 = arith.constant 3 : i32
    %14 = vector.broadcast %c3_i32 : i32 to vector<7x128xi32>
    %15 = arith.select %13, %14, %12 : vector<7x128xi1>, vector<7x128xi32>
    %c3_i32_4 = arith.constant 3 : i32
    %16 = vector.broadcast %c3_i32_4 : i32 to vector<7x128xi32>
    %17 = arith.subi %16, %15 : vector<7x128xi32>
    %18 = arith.minsi %15, %17 : vector<7x128xi32>
    %c1_i32_5 = arith.constant 1 : i32
    %19 = vector.broadcast %c1_i32_5 : i32 to vector<7x128xi32>
    %20 = arith.minsi %18, %19 : vector<7x128xi32>
    %c0_i32_6 = arith.constant 0 : i32
    %21 = vector.broadcast %c0_i32_6 : i32 to vector<7x128xi32>
    %22 = arith.maxsi %20, %21 : vector<7x128xi32>
    %cst = arith.constant 1.000000e+00 : f32
    %23 = vector.broadcast %cst : f32 to vector<7x128xf32>
    %c1_i32_7 = arith.constant 1 : i32
    %24 = vector.broadcast %c1_i32_7 : i32 to vector<7x128xi32>
    %25 = arith.cmpi eq, %22, %24 : vector<7x128xi32>
    %cst_8 = arith.constant 5.000000e-01 : f32
    %26 = vector.broadcast %cst_8 : f32 to vector<7x128xf32>
    %27 = arith.select %25, %26, %23 : vector<7x128xi1>, vector<7x128xf32>
    %cst_9 = arith.constant 0.000000e+00 : f32
    %28 = vector.broadcast %cst_9 : f32 to vector<7x128xf32>
    %c0_i32_10 = arith.constant 0 : i32
    %29 = vector.broadcast %c0_i32_10 : i32 to vector<7x128xi32>
    %30 = arith.subi %29, %15 : vector<7x128xi32>
    %31 = math.absi %30 : vector<7x128xi32>
    %32 = arith.cmpi sle, %31, %22 : vector<7x128xi32>
    %33 = arith.sitofp %31 : vector<7x128xi32> to vector<7x128xf32>
    %34 = arith.mulf %33, %27 : vector<7x128xf32>
    %cst_11 = arith.constant 1.000000e+00 : f32
    %35 = vector.broadcast %cst_11 : f32 to vector<7x128xf32>
    %36 = arith.subf %35, %34 : vector<7x128xf32>
    %37 = arith.mulf %36, %27 : vector<7x128xf32>
    %cst_12 = arith.constant 0.000000e+00 : f32
    %38 = vector.broadcast %cst_12 : f32 to vector<7x128xf32>
    %39 = arith.select %32, %37, %38 : vector<7x128xi1>, vector<7x128xf32>
    %40 = arith.mulf %39, %0 : vector<7x128xf32>
    %41 = arith.addf %28, %40 : vector<7x128xf32>
    %c1_i32_13 = arith.constant 1 : i32
    %42 = vector.broadcast %c1_i32_13 : i32 to vector<7x128xi32>
    %43 = arith.subi %42, %15 : vector<7x128xi32>
    %44 = math.absi %43 : vector<7x128xi32>
    %45 = arith.cmpi sle, %44, %22 : vector<7x128xi32>
    %46 = arith.sitofp %44 : vector<7x128xi32> to vector<7x128xf32>
    %47 = arith.mulf %46, %27 : vector<7x128xf32>
    %cst_14 = arith.constant 1.000000e+00 : f32
    %48 = vector.broadcast %cst_14 : f32 to vector<7x128xf32>
    %49 = arith.subf %48, %47 : vector<7x128xf32>
    %50 = arith.mulf %49, %27 : vector<7x128xf32>
    %cst_15 = arith.constant 0.000000e+00 : f32
    %51 = vector.broadcast %cst_15 : f32 to vector<7x128xf32>
    %52 = arith.select %45, %50, %51 : vector<7x128xi1>, vector<7x128xf32>
    %53 = arith.mulf %52, %1 : vector<7x128xf32>
    %54 = arith.addf %41, %53 : vector<7x128xf32>
    %c2_i32_16 = arith.constant 2 : i32
    %55 = vector.broadcast %c2_i32_16 : i32 to vector<7x128xi32>
    %56 = arith.subi %55, %15 : vector<7x128xi32>
    %57 = math.absi %56 : vector<7x128xi32>
    %58 = arith.cmpi sle, %57, %22 : vector<7x128xi32>
    %59 = arith.sitofp %57 : vector<7x128xi32> to vector<7x128xf32>
    %60 = arith.mulf %59, %27 : vector<7x128xf32>
    %cst_17 = arith.constant 1.000000e+00 : f32
    %61 = vector.broadcast %cst_17 : f32 to vector<7x128xf32>
    %62 = arith.subf %61, %60 : vector<7x128xf32>
    %63 = arith.mulf %62, %27 : vector<7x128xf32>
    %cst_18 = arith.constant 0.000000e+00 : f32
    %64 = vector.broadcast %cst_18 : f32 to vector<7x128xf32>
    %65 = arith.select %58, %63, %64 : vector<7x128xi1>, vector<7x128xf32>
    %66 = arith.mulf %65, %2 : vector<7x128xf32>
    %67 = arith.addf %54, %66 : vector<7x128xf32>
    %c3_i32_19 = arith.constant 3 : i32
    %68 = vector.broadcast %c3_i32_19 : i32 to vector<7x128xi32>
    %69 = arith.subi %68, %15 : vector<7x128xi32>
    %70 = math.absi %69 : vector<7x128xi32>
    %71 = arith.cmpi sle, %70, %22 : vector<7x128xi32>
    %72 = arith.sitofp %70 : vector<7x128xi32> to vector<7x128xf32>
    %73 = arith.mulf %72, %27 : vector<7x128xf32>
    %cst_20 = arith.constant 1.000000e+00 : f32
    %74 = vector.broadcast %cst_20 : f32 to vector<7x128xf32>
    %75 = arith.subf %74, %73 : vector<7x128xf32>
    %76 = arith.mulf %75, %27 : vector<7x128xf32>
    %cst_21 = arith.constant 0.000000e+00 : f32
    %77 = vector.broadcast %cst_21 : f32 to vector<7x128xf32>
    %78 = arith.select %71, %76, %77 : vector<7x128xi1>, vector<7x128xf32>
    %79 = arith.mulf %78, %3 : vector<7x128xf32>
    %80 = arith.addf %67, %79 : vector<7x128xf32>
    %c0_22 = arith.constant 0 : index
    %c0_23 = arith.constant 0 : index
    %81 = vector.load %arg2[%c0_22, %c0_23] : memref<7x128xf32, #tpu.memory_space<vmem>>, vector<7x128xf32>
    tpu.vector_store %arg2[%c0_22, %c0_23], %80 {strides = array<i32>} : memref<7x128xf32, #tpu.memory_space<vmem>>, vector<7x128xf32>,
    return
  }
  func.func @transform_0(%arg0: i32) -> (i32, i32) {
    %c0_i32 = arith.constant 0 : i32
    %c0_i32_0 = arith.constant 0 : i32
    return %c0_i32, %arg0 : i32, i32
  }
  func.func @transform_1(%arg0: i32) -> (i32, i32) {
    %c0_i32 = arith.constant 0 : i32
    %c0_i32_0 = arith.constant 0 : i32
    return %c0_i32, %arg0 : i32, i32
  }
}

</mosaic_0001>

<llo_original>
// kernel: tpu_custom_call.1
$region0: #{tpu_custom_call.1}
  #allocation0 [shape = 'u32[]', space=smem, size = 0x4, offset = 0x4, fixed_abs, tag = 'smem constant byte address 0x4 - core index']
  #allocation1 [shape = 'u32[144,128]{1,0:T(1,128)}', space=vmem, size = 0x12000, scoped, tag = 'internal scratch']
  %s0 = inlined_call_operand.hbm [shape: f32[16,128], index: 0, kind: input, shape index: {}]
  %s1 = inlined_call_operand.hbm [shape: f32[7,128], index: 1, kind: output, shape index: {}]
  %s2 = sld [smem:[#allocation0]]
  $region18: #{tpu_custom_call.1} parent=0
    _
  %s4 = ssub.s32 1, %s2
  %s5 = scalar_select 0, %s4, %s2
  $region1: #{tpu_custom_call.1} parent=0
    #allocation2 [shape = 'u8[8192]{0}', space=vmem, size = 0x2000, scoped, tag = 'input window, operand 0, single buffered']
    #allocation3 [shape = 's32[1]{0}', space=sflag, size = 0x4, scoped, tag = 'scoped memory for tpu_custom_call.1']
    #allocation4 [shape = 's32[1]{0}', space=sflag, size = 0x4, scoped, tag = 'scoped memory for tpu_custom_call.1']
    #allocation5 [shape = 'u8[4096]{0}', space=vmem, size = 0x1000, scoped, tag = 'output window, operand 0, single buffered']
    %6 = vsyncpa [#allocation3], 0
    %7 = vsyncpa [#allocation4], 0
    // Predicated region
    $region2: #{tpu_custom_call.1} parent=1 // pred_check
      _
    $region3: #{tpu_custom_call.1} parent=1 // pred_check_branch
      %9 = sbr.rel (0) target = $region5
    $region4: #{tpu_custom_call.1} parent=1 // pred_region
      %s11 = ssub.s32 256, 256
      %12 = vsyncadd [#allocation3], %s11
      %s13 = sshll.u32 [#allocation2], 4
      %s14 = int_to_ptr.vmem [resolvable:$true] %s13
      %19 = dma.hbm_to_vmem [thread:$0]  %s0, 256, %s14, [#allocation3], 128, 128, 8
    $region5: #{tpu_custom_call.1} parent=1 // pred_fallthru
      _
    // Predicated region
    $region6: #{tpu_custom_call.1} parent=1 // pred_check
      _
    $region7: #{tpu_custom_call.1} parent=1 // pred_check_branch
      %21 = sbr.rel (0) target = $region9
    $region8: #{tpu_custom_call.1} parent=1 // pred_region
      %22 = dma.done [#allocation3], 256
    $region9: #{tpu_custom_call.1} parent=1 // pred_fallthru
      _
    %v23 = vld [vmem:[#allocation2] ss:$2 sm:$0x7f]
    %s24 = scalar_lea.vmem [#allocation2], 1
    %v25 = vld [vmem:[%s24] ss:$2 sm:$0x7f]
    %s26 = scalar_lea.vmem [#allocation2], 2
    %v27 = vld [vmem:[%s26] ss:$2 sm:$0x7f]
    %s28 = scalar_lea.vmem [#allocation2], 3
    %v29 = vld [vmem:[%s28] ss:$2 sm:$0x7f]
    %vm30 = vcmp.gt.f32.partialorder %v25, %v23
    %v31 = vsel %vm30, %v25, %v23
    %v32 = vsel %vm30, 1, 0
    %vm33 = vcmp.gt.f32.partialorder %v27, %v31
    %v34 = vsel %vm33, %v27, %v31
    %v35 = vsel %vm33, 2, %v32
    %vm36 = vcmp.gt.f32.partialorder %v29, %v34
    %v37 = vsel %vm36, 3, %v35
    %v38 = vsub.s32 3, %v37
    %vm39 = vcmp.lt.s32.totalorder %v37, %v38
    %v40 = vsel %vm39, %v37, %v38
    %vm41 = vcmp.lt.s32.totalorder %v40, 1
    %v42 = vsel %vm41, %v40, 1
    %vm43 = vcmp.gt.s32.totalorder %v42, 0
    %v44 = vsel %vm43, %v42, 0
    %vm45 = vcmp.eq.s32.totalorder %v44, 1
    %v46 = vsel %vm45, 0.5, 1.0
    %v47 = vsub.s32 0, %v37
    %vm48 = vcmp.lt.s32.totalorder %v47, 0
    %v49 = vsub.s32 0, %v47
    %v50 = vsel %vm48, %v49, %v47
    %vm51 = vcmp.le.s32.totalorder %v50, %v44
    %v52 = vcvt.s32.f32 %v50
    %v53 = vmul.f32 %v52, %v46
    %v54 = vsub.f32 1.0, %v53
    %v55 = vmul.f32 %v54, %v46
    %v56 = vsel %vm51, %v55, 0.0
    %v57 = vmul.f32 %v56, %v23
    %v58 = vadd.f32 %v57, 0.0
    %v59 = vsub.s32 1, %v37
    %vm60 = vcmp.lt.s32.totalorder %v59, 0
    %v61 = vsub.s32 0, %v59
    %v62 = vsel %vm60, %v61, %v59
    %vm63 = vcmp.le.s32.totalorder %v62, %v44
    %v64 = vcvt.s32.f32 %v62
    %v65 = vmul.f32 %v64, %v46
    %v66 = vsub.f32 1.0, %v65
    %v67 = vmul.f32 %v66, %v46
    %v68 = vsel %vm63, %v67, 0.0
    %v69 = vmul.f32 %v68, %v25
    %v70 = vadd.f32 %v58, %v69
    %v71 = vsub.s32 2, %v37
    %vm72 = vcmp.lt.s32.totalorder %v71, 0
    %v73 = vsub.s32 0, %v71
    %v74 = vsel %vm72, %v73, %v71
    %vm75 = vcmp.le.s32.totalorder %v74, %v44
    %v76 = vcvt.s32.f32 %v74
    %v77 = vmul.f32 %v76, %v46
    %v78 = vsub.f32 1.0, %v77
    %v79 = vmul.f32 %v78, %v46
    %v80 = vsel %vm75, %v79, 0.0
    %v81 = vmul.f32 %v80, %v27
    %v82 = vadd.f32 %v70, %v81
    %vm83 = vcmp.lt.s32.totalorder %v38, 0
    %v84 = vsub.s32 0, %v38
    %v85 = vsel %vm83, %v84, %v38
    %vm86 = vcmp.le.s32.totalorder %v85, %v44
    %v87 = vcvt.s32.f32 %v85
    %v88 = vmul.f32 %v87, %v46
    %v89 = vsub.f32 1.0, %v88
    %v90 = vmul.f32 %v89, %v46
    %v91 = vsel %vm86, %v90, 0.0
    %v92 = vmul.f32 %v91, %v29
    %v93 = vadd.f32 %v82, %v92
    %94 = vst [vmem:[#allocation5] sm:$0x7f] %v93
    // Predicated region
    $region10: #{tpu_custom_call.1} parent=1 // pred_check
      _
    $region11: #{tpu_custom_call.1} parent=1 // pred_check_branch
      %96 = sbr.rel (0) target = $region13
    $region12: #{tpu_custom_call.1} parent=1 // pred_region
      %s98 = ssub.s32 128, 128
      %99 = vsyncadd [#allocation4], %s98
      %s101 = sshll.u32 [#allocation5], 4
      %s102 = int_to_ptr.vmem [resolvable:$true] %s101
      %104 = dma.vmem_to_hbm [thread:$0]  %s102, 128, %s1, [#allocation4]
    $region13: #{tpu_custom_call.1} parent=1 // pred_fallthru
      _
    // Predicated region
    $region14: #{tpu_custom_call.1} parent=1 // pred_check
      _
    $region15: #{tpu_custom_call.1} parent=1 // pred_check_branch
      %106 = sbr.rel (0) target = $region17
    $region16: #{tpu_custom_call.1} parent=1 // pred_region
      %107 = dma.done [#allocation4], 128
    $region17: #{tpu_custom_call.1} parent=1 // pred_fallthru
      _
    %108 = vsyncpa [#allocation3], 1
    %109 = vsyncpa [#allocation4], 1

</llo_original>
